<compile_context>
chip_gen: v7x
topology: tpu7x:2x2x1
jax: 0.10.0
libtpu: 0.0.40
codegen_flags: <defaults>
</compile_context>

<pallas_src>
import functools

import jax
import jax.numpy as jnp
from jax import lax
from jax.experimental import pallas as pl
from jax.experimental.pallas import tpu as pltpu

EPS = 1e-5

# Explicit scoped-VMEM limit (v5e default is only 16 MiB); blocks here are tiny.
_VMEM_LIMIT_BYTES = 32 * 1024 * 1024
_PARALLEL = pltpu.CompilerParams(
    dimension_semantics=("parallel",),
    vmem_limit_bytes=_VMEM_LIMIT_BYTES,
)

# Below this Cin the concatenated patch matrix is cheap; above it, accumulate
# 9 MXU dots instead of materializing the (9*Cin, HW) concat.
_ACC_DOT_MIN_CIN = 128


def _round_up(x, m):
    return (x + m - 1) // m * m


# ---------------------------------------------------------------------------
# pltpu.roll direction probe (defensive: only picks the sign of static shifts)
# ---------------------------------------------------------------------------
_ROLL_NP_LIKE = None


def _roll_matches_numpy() -> bool:
    """Verify pltpu.roll follows np.roll semantics (out[i] = in[i - shift]).

    Falls back to the documented np.roll convention when no device is
    available (chip-less AOT compilation / interpret flows), so this probe is
    never a deployment hazard; on real TPUs it is verified once per process.
    """
    global _ROLL_NP_LIKE
    if _ROLL_NP_LIKE is None:
        def probe_kernel(x_ref, o_ref):
            o_ref[...] = pltpu.roll(x_ref[...], 1, 1)

        try:
            with jax.ensure_compile_time_eval():
                x = jnp.tile(jnp.arange(128, dtype=jnp.float32)[None, :], (8, 1))
                y = pl.pallas_call(
                    probe_kernel,
                    out_shape=jax.ShapeDtypeStruct((8, 128), jnp.float32))(x)
                first = float(y[0, 0])
        except Exception:                       # no device: assume np.roll
            _ROLL_NP_LIKE = True
        else:
            if first == 127.0:
                _ROLL_NP_LIKE = True            # np.roll convention
            elif first == 1.0:
                _ROLL_NP_LIKE = False           # reversed convention
            else:
                raise RuntimeError(f"unexpected pltpu.roll semantics: {first}")
    return _ROLL_NP_LIKE


def _tap_list(W, HW, np_like):
    """(dy, dx, lane-roll) per 3x3 tap so output lane q reads a[:, q + off]."""
    taps = []
    for dy in range(3):
        for dx in range(3):
            off = (dy - 1) * W + (dx - 1)
            shift = ((-off) if np_like else off) % HW
            taps.append((dy, dx, shift))
    return tuple(taps)


def _fold_weight(w_hwio, cin_padded, dtype):
    """(3,3,Cin,Cout) HWIO conv weight -> (Cout, 9*Cin_padded) matmul weight."""
    kh, kw, cin, cout = w_hwio.shape
    w = jnp.pad(w_hwio, ((0, 0), (0, 0), (0, cin_padded - cin), (0, 0)))
    return w.reshape(kh * kw * cin_padded, cout).T.astype(dtype)


# ---------------------------------------------------------------------------
# In-kernel 3x3 "same" convolution on a (C, H*W) lane-dense activation
# ---------------------------------------------------------------------------
def _conv3x3(x, w_ref, col, H, W, taps):
    """x: (Cp, HW) f32.  w_ref: (Cout, 9*Cp) Ref.  col: (1, HW) f32 col index.

    Returns the conv output (Cout, HW) in f32 (MXU accumulation).  Taps are
    built by XLU lane rolls; the zero 'same' padding is implemented with 0/1
    halo masks: row masks from an in-kernel lane iota, column masks from the
    precomputed column-index stream (avoids integer div/mod on the VPU).
    """
    HW = H * W
    cp = x.shape[0]
    cdtype = w_ref.dtype

    lane = lax.broadcasted_iota(jnp.int32, (1, HW), 1)
    row_mask = {0: (lane >= W).astype(jnp.float32),        # needs row >= 1
                2: (lane < HW - W).astype(jnp.float32)}    # needs row <= H-2
    col_mask = {0: (col >= 1.0).astype(jnp.float32),       # needs col >= 1
                2: (col <= float(W - 2)).astype(jnp.float32)}  # col <= W-2

    tap_vals = []
    for dy, dx, shift in taps:
        v = x if shift == 0 else pltpu.roll(x, shift, 1)   # XLU lane shift
        m = row_mask.get(dy)
        cm = col_mask.get(dx)
        if cm is not None:
            m = cm if m is None else m * cm
        if m is not None:
            v = v * m                                       # f32 halo zeroing
        tap_vals.append(v.astype(cdtype))                   # per-tap downcast

    if cp >= _ACC_DOT_MIN_CIN:
        # Large Cin: accumulate 9 MXU dots; never materialize the big concat.
        acc = None
        for t, v in enumerate(tap_vals):
            part = jnp.dot(w_ref[:, t * cp:(t + 1) * cp], v,
                           preferred_element_type=jnp.float32)
            acc = part if acc is None else acc + part
        return acc

    patches = jnp.concatenate(tap_vals, axis=0)             # (9*Cp, HW) bf16
    return jnp.dot(w_ref[...], patches, preferred_element_type=jnp.float32)


# ---------------------------------------------------------------------------
# Pallas kernels
# ---------------------------------------------------------------------------
def _conv_bn_stats_kernel(x_ref, w_ref, col_ref, y_ref, sum_ref, ssq_ref,
                          *, H, W, taps):
    """conv1 + per-channel sum / sum-of-squares for the BN1 statistics."""
    x = x_ref[0].astype(jnp.float32)                         # (Cin_p, HW) f32
    y = _conv3x3(x, w_ref, col_ref[...], H, W, taps)         # (Cout, HW) f32
    y_ref[0] = y.astype(y_ref.dtype)                         # bf16 HBM store
    # NOTE: E[x^2]-E[x]^2 in f32 is fine for conv outputs (near-zero mean);
    # switch to a shifted/Welford form if activations can have large means.
    sum_ref[0] = jnp.sum(y, axis=1, keepdims=True)
    ssq_ref[0] = jnp.sum(y * y, axis=1, keepdims=True)


def _bnrelu_conv_bn_stats_kernel(y1_ref, s_ref, b_ref, w_ref, col_ref,
                                 y2_ref, sum_ref, ssq_ref, *, H, W, taps):
    """BN1-affine + ReLU (f32) fused into conv2 + BN2 moment accumulation."""
    a = jnp.maximum(y1_ref[0].astype(jnp.float32) * s_ref[...] + b_ref[...], 0.0)
    y = _conv3x3(a, w_ref, col_ref[...], H, W, taps)
    y2_ref[0] = y.astype(y2_ref.dtype)
    sum_ref[0] = jnp.sum(y, axis=1, keepdims=True)
    ssq_ref[0] = jnp.sum(y * y, axis=1, keepdims=True)


def _bn_relu_kernel(y_ref, s_ref, b_ref, o_ref):
    """Final BN2-affine + ReLU (bf16 reload, f32 elementwise, f32 store)."""
    o_ref[0] = jnp.maximum(y_ref[0].astype(jnp.float32) * s_ref[...] + b_ref[...], 0.0)


# ---------------------------------------------------------------------------
# pallas_call wrappers
# ---------------------------------------------------------------------------
def _conv_bn_stats(x, wmat, col, H, W, taps):
    N, Cp, HW = x.shape
    Cout, K9 = wmat.shape
    return pl.pallas_call(
        functools.partial(_conv_bn_stats_kernel, H=H, W=W, taps=taps),
        out_shape=(jax.ShapeDtypeStruct((N, Cout, HW), wmat.dtype),   # bf16 y1
                   jax.ShapeDtypeStruct((N, Cout, 1), jnp.float32),
                   jax.ShapeDtypeStruct((N, Cout, 1), jnp.float32)),
        grid=(N,),
        in_specs=[pl.BlockSpec((1, Cp, HW), lambda n: (n, 0, 0)),
                  pl.BlockSpec((Cout, K9), lambda n: (0, 0)),
                  pl.BlockSpec((1, HW), lambda n: (0, 0))],
        out_specs=(pl.BlockSpec((1, Cout, HW), lambda n: (n, 0, 0)),
                   pl.BlockSpec((1, Cout, 1), lambda n: (n, 0, 0)),
                   pl.BlockSpec((1, Cout, 1), lambda n: (n, 0, 0))),
        compiler_params=_PARALLEL,
    )(x, wmat, col)


def _bnrelu_conv_bn_stats(y1, scale, shift, wmat, col, H, W, taps):
    N, Cmid, HW = y1.shape
    Cout, K9 = wmat.shape
    return pl.pallas_call(
        functools.partial(_bnrelu_conv_bn_stats_kernel, H=H, W=W, taps=taps),
        out_shape=(jax.ShapeDtypeStruct((N, Cout, HW), wmat.dtype),   # bf16 y2
                   jax.ShapeDtypeStruct((N, Cout, 1), jnp.float32),
                   jax.ShapeDtypeStruct((N, Cout, 1), jnp.float32)),
        grid=(N,),
        in_specs=[pl.BlockSpec((1, Cmid, HW), lambda n: (n, 0, 0)),
                  pl.BlockSpec((Cmid, 1), lambda n: (0, 0)),
                  pl.BlockSpec((Cmid, 1), lambda n: (0, 0)),
                  pl.BlockSpec((Cout, K9), lambda n: (0, 0)),
                  pl.BlockSpec((1, HW), lambda n: (0, 0))],
        out_specs=(pl.BlockSpec((1, Cout, HW), lambda n: (n, 0, 0)),
                   pl.BlockSpec((1, Cout, 1), lambda n: (n, 0, 0)),
                   pl.BlockSpec((1, Cout, 1), lambda n: (n, 0, 0))),
        compiler_params=_PARALLEL,
    )(y1, scale, shift, wmat, col)


def _bn_relu(y, scale, shift):
    N, C, HW = y.shape
    return pl.pallas_call(
        _bn_relu_kernel,
        out_shape=jax.ShapeDtypeStruct((N, C, HW), jnp.float32),
        grid=(N,),
        in_specs=[pl.BlockSpec((1, C, HW), lambda n: (n, 0, 0)),
                  pl.BlockSpec((C, 1), lambda n: (0, 0)),
                  pl.BlockSpec((C, 1), lambda n: (0, 0))],
        out_specs=pl.BlockSpec((1, C, HW), lambda n: (n, 0, 0)),
        compiler_params=_PARALLEL,
    )(y, scale, shift)


def _bn_scale_shift(part_sum, part_ssq, gamma, beta, count):
    """Fold batch moments into the BN affine (training mode, biased variance)."""
    s = jnp.sum(part_sum, axis=0)                 # (C, 1)
    ss = jnp.sum(part_ssq, axis=0)                # (C, 1)
    mean = s / count
    var = jnp.maximum(ss / count - mean * mean, 0.0)
    scale = gamma.reshape(-1, 1) / jnp.sqrt(var + EPS)
    shift = beta.reshape(-1, 1) - mean * scale
    return scale.astype(jnp.float32), shift.astype(jnp.float32)


def double_conv(x_nchw, params, *, conv_dtype=jnp.bfloat16):
    """DoubleConv forward (training-mode BatchNorm).  NCHW in / NCHW out (f32)."""
    w1, g1, b1, w2, g2, b2 = params
    N, Cin, H, W = x_nchw.shape
    Cmid, Cout = w1.shape[-1], w2.shape[-1]
    HW = H * W
    assert Cmid % 8 == 0 and Cout % 8 == 0, "mid/out channels must be multiples of 8"
    # TODO(synk): generalize to non-multiple-of-8 mid/out channels by padding
    # them the same way the input channels are padded below.

    cin_p = _round_up(Cin, 8)                 # sublane-align the im2col pieces
    x = x_nchw.reshape(N, Cin, HW).astype(conv_dtype)      # bf16 input stream
    if cin_p != Cin:
        x = jnp.pad(x, ((0, 0), (0, cin_p - Cin), (0, 0)))

    # (1, HW) f32 column index: the only host-side mask material the kernels need.
    col = jnp.broadcast_to(jnp.arange(W, dtype=jnp.float32)[None, :],
                           (H, W)).reshape(1, HW)
    taps = _tap_list(W, HW, _roll_matches_numpy())
    w1m = _fold_weight(w1, cin_p, conv_dtype)  # (Cmid, 9*cin_p) MXU operand
    w2m = _fold_weight(w2, Cmid, conv_dtype)   # (Cout, 9*Cmid)
    count = N * HW

    y1, s1, q1 = _conv_bn_stats(x, w1m, col, H, W, taps)                    # A
    sc1, sh1 = _bn_scale_shift(s1, q1, g1, b1, count)                       # O(C)
    y2, s2, q2 = _bnrelu_conv_bn_stats(y1, sc1, sh1, w2m, col, H, W, taps)  # B
    sc2, sh2 = _bn_scale_shift(s2, q2, g2, b2, count)                       # O(C)
    out = _bn_relu(y2, sc2, sh2)                                            # C
    return out.reshape(N, Cout, H, W)


# ---------------------------------------------------------------------------
# Pure-JAX reference (same semantics) for the self-check
# ---------------------------------------------------------------------------
def _ref_double_conv(x_nchw, params):
    w1, g1, b1, w2, g2, b2 = params

    def conv(x, w):  # w is HWIO (3,3,Cin,Cout) -> OIHW for lax
        w_oihw = jnp.transpose(w, (3, 2, 0, 1))
        return lax.conv_general_dilated(
            x, w_oihw, window_strides=(1, 1), padding="SAME",
            dimension_numbers=("NCHW", "OIHW", "NCHW"))

    def bn_relu(y, g, b):
        mean = jnp.mean(y, axis=(0, 2, 3), keepdims=True)
        var = jnp.mean(jnp.square(y - mean), axis=(0, 2, 3), keepdims=True)
        yn = (y - mean) / jnp.sqrt(var + EPS)
        yn = yn * g.reshape(1, -1, 1, 1) + b.reshape(1, -1, 1, 1)
        return jnp.maximum(yn, 0.0)

    return bn_relu(conv(bn_relu(conv(x_nchw, w1), g1, b1), w2), g2, b2)


# ---------------------------------------------------------------------------
if __name__ == "__main__":
    # Small shapes consistent with the module: in_channels=4, out_channels=8
    # (mid_channels defaults to out_channels), batch=2, spatial=16x16.
    N, Cin, Cmid, Cout, H, W = 2, 4, 8, 8, 16, 16

    kx, k1, k2, k3, k4, k5, k6 = jax.random.split(jax.random.PRNGKey(0), 7)
    w1 = 0.1 * jax.random.normal(k1, (3, 3, Cin, Cmid), dtype=jnp.float32)
    g1 = 1.0 + 0.1 * jax.random.normal(k2, (Cmid,), dtype=jnp.float32)
    b1 = 0.1 * jax.random.normal(k3, (Cmid,), dtype=jnp.float32)
    w2 = 0.1 * jax.random.normal(k4, (3, 3, Cmid, Cout), dtype=jnp.float32)
    g2 = 1.0 + 0.1 * jax.random.normal(k5, (Cout,), dtype=jnp.float32)
    b2 = 0.1 * jax.random.normal(k6, (Cout,), dtype=jnp.float32)
    params = (w1, g1, b1, w2, g2, b2)
    x = jax.random.normal(kx, (N, Cin, H, W), dtype=jnp.float32)

    ref = jax.block_until_ready(_ref_double_conv(x, params))

    # f32 path (f32 MXU operands + f32 intermediates): tight structural check.
    out_f32 = jax.block_until_ready(double_conv(x, params, conv_dtype=jnp.float32))
    assert out_f32.shape == (N, Cout, H, W)
    err_f32 = float(jnp.max(jnp.abs(out_f32 - ref)))
    assert jnp.allclose(out_f32, ref, atol=1e-4, rtol=1e-4), \
        f"f32 path max abs err {err_f32}"

    # Default bf16 path (bf16 operands + bf16 HBM intermediates, f32 accum):
    # loose tolerance for bf16 rounding only; structure is proven by f32 check.
    out_bf16 = jax.block_until_ready(double_conv(x, params))
    err_bf16 = float(jnp.max(jnp.abs(out_bf16 - ref)))
    assert jnp.allclose(out_bf16, ref, atol=1e-1, rtol=1e-1), \
        f"bf16 path max abs err {err_bf16}"

    print("KERNEL_OK")
</pallas_src>

<mosaic_0001>
module attributes {stable_mosaic.version = 11 : i64} {
  func.func @probe_kernel(%arg0: memref<8x128xf32, #tpu.memory_space<vmem>>, %arg1: memref<8x128xf32, #tpu.memory_space<vmem>>) attributes {dimension_semantics = [], scalar_prefetch = 0 : i64, scratch_operands = 0 : i64, tpu.core_type = #tpu.core_type<tc>} {
    %c0 = arith.constant 0 : index
    %c0_0 = arith.constant 0 : index
    %0 = vector.load %arg0[%c0, %c0_0] : memref<8x128xf32, #tpu.memory_space<vmem>>, vector<8x128xf32>
    %c1_i32 = arith.constant 1 : i32
    %1 = tpu.dynamic_rotate %0 by %c1_i32 dim 1 : vector<8x128xf32>, i32 -> vector<8x128xf32>
    %c0_1 = arith.constant 0 : index
    %c0_2 = arith.constant 0 : index
    %2 = vector.load %arg1[%c0_1, %c0_2] : memref<8x128xf32, #tpu.memory_space<vmem>>, vector<8x128xf32>
    tpu.vector_store %arg1[%c0_1, %c0_2], %1 {strides = array<i32>} : memref<8x128xf32, #tpu.memory_space<vmem>>, vector<8x128xf32>,
    return
  }
}

module attributes {stable_mosaic.version = 11 : i64} {
  func.func @_conv_bn_stats_kernel(%arg0: i32, %arg1: memref<1x8x256xf32, #tpu.memory_space<vmem>>, %arg2: memref<8x72xf32, #tpu.memory_space<vmem>>, %arg3: memref<1x256xf32, #tpu.memory_space<vmem>>, %arg4: memref<1x8x256xf32, #tpu.memory_space<vmem>>, %arg5: memref<1x8x1xf32, #tpu.memory_space<vmem>>, %arg6: memref<1x8x1xf32, #tpu.memory_space<vmem>>) attributes {dimension_semantics = [#tpu.dimension_semantics<parallel>], iteration_bounds = array<i64: 2>, scalar_prefetch = 0 : i64, scratch_operands = 0 : i64, tpu.core_type = #tpu.core_type<tc>, window_params = [{transform_indices = @transform_0, window_bounds = array<i64: 1, 8, 256>}, {pipeline_mode = #tpu.pipeline_mode<synchronous>, transform_indices = @transform_1, window_bounds = array<i64: 8, 72>}, {pipeline_mode = #tpu.pipeline_mode<synchronous>, transform_indices = @transform_2, window_bounds = array<i64: 1, 256>}, {transform_indices = @transform_3, window_bounds = array<i64: 1, 8, 256>}, {transform_indices = @transform_4, window_bounds = array<i64: 1, 8, 1>}, {transform_indices = @transform_5, window_bounds = array<i64: 1, 8, 1>}]} {
    %c0 = arith.constant 0 : index
    %c0_0 = arith.constant 0 : index
    %c0_1 = arith.constant 0 : index
    %0 = vector.load %arg1[%c0, %c0_0, %c0_1] : memref<1x8x256xf32, #tpu.memory_space<vmem>>, vector<1x8x256xf32>
    %1 = vector.shape_cast %0 : vector<1x8x256xf32> to vector<8x256xf32>
    %c0_2 = arith.constant 0 : index
    %c0_3 = arith.constant 0 : index
    %2 = vector.load %arg3[%c0_2, %c0_3] : memref<1x256xf32, #tpu.memory_space<vmem>>, vector<1x256xf32>
    %3 = tpu.iota {dimensions = array<i32: 1>} : vector<1x256xi32>
    %c16_i32 = arith.constant 16 : i32
    %4 = vector.broadcast %c16_i32 : i32 to vector<1x256xi32>
    %5 = arith.cmpi sge, %3, %4 : vector<1x256xi32>
    %6 = arith.extui %5 : vector<1x256xi1> to vector<1x256xi32>
    %7 = arith.sitofp %6 : vector<1x256xi32> to vector<1x256xf32>
    %c240_i32 = arith.constant 240 : i32
    %8 = vector.broadcast %c240_i32 : i32 to vector<1x256xi32>
    %9 = arith.cmpi slt, %3, %8 : vector<1x256xi32>
    %10 = arith.extui %9 : vector<1x256xi1> to vector<1x256xi32>
    %11 = arith.sitofp %10 : vector<1x256xi32> to vector<1x256xf32>
    %cst = arith.constant 1.000000e+00 : f32
    %12 = vector.broadcast %cst : f32 to vector<1x256xf32>
    %13 = arith.cmpf oge, %2, %12 : vector<1x256xf32>
    %14 = arith.extui %13 : vector<1x256xi1> to vector<1x256xi32>
    %15 = arith.sitofp %14 : vector<1x256xi32> to vector<1x256xf32>
    %cst_4 = arith.constant 1.400000e+01 : f32
    %16 = vector.broadcast %cst_4 : f32 to vector<1x256xf32>
    %17 = arith.cmpf ole, %2, %16 : vector<1x256xf32>
    %18 = arith.extui %17 : vector<1x256xi1> to vector<1x256xi32>
    %19 = arith.sitofp %18 : vector<1x256xi32> to vector<1x256xf32>
    %c17_i32 = arith.constant 17 : i32
    %20 = tpu.dynamic_rotate %1 by %c17_i32 dim 1 : vector<8x256xf32>, i32 -> vector<8x256xf32>
    %21 = arith.mulf %7, %15 : vector<1x256xf32>
    %22 = vector.broadcast %21 : vector<1x256xf32> to vector<8x256xf32>
    %23 = arith.mulf %20, %22 : vector<8x256xf32>
    %c16_i32_5 = arith.constant 16 : i32
    %24 = tpu.dynamic_rotate %1 by %c16_i32_5 dim 1 : vector<8x256xf32>, i32 -> vector<8x256xf32>
    %25 = vector.broadcast %7 : vector<1x256xf32> to vector<8x256xf32>
    %26 = arith.mulf %24, %25 : vector<8x256xf32>
    %c15_i32 = arith.constant 15 : i32
    %27 = tpu.dynamic_rotate %1 by %c15_i32 dim 1 : vector<8x256xf32>, i32 -> vector<8x256xf32>
    %28 = arith.mulf %7, %19 : vector<1x256xf32>
    %29 = vector.broadcast %28 : vector<1x256xf32> to vector<8x256xf32>
    %30 = arith.mulf %27, %29 : vector<8x256xf32>
    %c1_i32 = arith.constant 1 : i32
    %31 = tpu.dynamic_rotate %1 by %c1_i32 dim 1 : vector<8x256xf32>, i32 -> vector<8x256xf32>
    %32 = vector.broadcast %15 : vector<1x256xf32> to vector<8x256xf32>
    %33 = arith.mulf %31, %32 : vector<8x256xf32>
    %c255_i32 = arith.constant 255 : i32
    %34 = tpu.dynamic_rotate %1 by %c255_i32 dim 1 : vector<8x256xf32>, i32 -> vector<8x256xf32>
    %35 = vector.broadcast %19 : vector<1x256xf32> to vector<8x256xf32>
    %36 = arith.mulf %34, %35 : vector<8x256xf32>
    %c241_i32 = arith.constant 241 : i32
    %37 = tpu.dynamic_rotate %1 by %c241_i32 dim 1 : vector<8x256xf32>, i32 -> vector<8x256xf32>
    %38 = arith.mulf %11, %15 : vector<1x256xf32>
    %39 = vector.broadcast %38 : vector<1x256xf32> to vector<8x256xf32>
    %40 = arith.mulf %37, %39 : vector<8x256xf32>
    %c240_i32_6 = arith.constant 240 : i32
    %41 = tpu.dynamic_rotate %1 by %c240_i32_6 dim 1 : vector<8x256xf32>, i32 -> vector<8x256xf32>
    %42 = vector.broadcast %11 : vector<1x256xf32> to vector<8x256xf32>
    %43 = arith.mulf %41, %42 : vector<8x256xf32>
    %c239_i32 = arith.constant 239 : i32
    %44 = tpu.dynamic_rotate %1 by %c239_i32 dim 1 : vector<8x256xf32>, i32 -> vector<8x256xf32>
    %45 = arith.mulf %11, %19 : vector<1x256xf32>
    %46 = vector.broadcast %45 : vector<1x256xf32> to vector<8x256xf32>
    %47 = arith.mulf %44, %46 : vector<8x256xf32>
    %48 = tpu.concatenate %23, %26, %30, %33, %1, %36, %40, %43, %47 in 0 : vector<8x256xf32>, vector<8x256xf32>, vector<8x256xf32>, vector<8x256xf32>, vector<8x256xf32>, vector<8x256xf32>, vector<8x256xf32>, vector<8x256xf32>, vector<8x256xf32> -> vector<72x256xf32>
    %c0_7 = arith.constant 0 : index
    %c0_8 = arith.constant 0 : index
    %49 = vector.load %arg2[%c0_7, %c0_8] : memref<8x72xf32, #tpu.memory_space<vmem>>, vector<8x72xf32>
    %cst_9 = arith.constant dense<0.000000e+00> : vector<8x256xf32>
    %50 = tpu.matmul %49, %48, %cst_9 {dimension_numbers = #tpu.dot_dimension_numbers<[1], [0], [0], [1], [0, 0, 1, 1], [], []>} : vector<8x72xf32>, vector<72x256xf32>, vector<8x256xf32> -> vector<8x256xf32>
    %c0_10 = arith.constant 0 : index
    %c0_11 = arith.constant 0 : index
    %c0_12 = arith.constant 0 : index
    %51 = vector.load %arg4[%c0_10, %c0_11, %c0_12] : memref<1x8x256xf32, #tpu.memory_space<vmem>>, vector<1x8x256xf32>
    %52 = vector.shape_cast %51 : vector<1x8x256xf32> to vector<8x256xf32>
    %53 = vector.shape_cast %50 : vector<8x256xf32> to vector<1x8x256xf32>
    tpu.vector_store %arg4[%c0_10, %c0_11, %c0_12], %53 {strides = array<i32>} : memref<1x8x256xf32, #tpu.memory_space<vmem>>, vector<1x8x256xf32>,
    %cst_13 = arith.constant dense<0.000000e+00> : vector<8xf32>
    %54 = vector.multi_reduction <add>, %50, %cst_13 [1] : vector<8x256xf32> to vector<8xf32>
    %55 = vector.shape_cast %54 : vector<8xf32> to vector<8x1xf32>
    %c0_14 = arith.constant 0 : index
    %c0_15 = arith.constant 0 : index
    %c0_16 = arith.constant 0 : index
    %56 = vector.load %arg5[%c0_14, %c0_15, %c0_16] : memref<1x8x1xf32, #tpu.memory_space<vmem>>, vector<1x8x1xf32>
    %57 = vector.shape_cast %56 : vector<1x8x1xf32> to vector<8x1xf32>
    %58 = vector.shape_cast %55 : vector<8x1xf32> to vector<1x8x1xf32>
    tpu.vector_store %arg5[%c0_14, %c0_15, %c0_16], %58 {strides = array<i32>} : memref<1x8x1xf32, #tpu.memory_space<vmem>>, vector<1x8x1xf32>,
    %59 = arith.mulf %50, %50 : vector<8x256xf32>
    %cst_17 = arith.constant dense<0.000000e+00> : vector<8xf32>
    %60 = vector.multi_reduction <add>, %59, %cst_17 [1] : vector<8x256xf32> to vector<8xf32>
    %61 = vector.shape_cast %60 : vector<8xf32> to vector<8x1xf32>
    %c0_18 = arith.constant 0 : index
    %c0_19 = arith.constant 0 : index
    %c0_20 = arith.constant 0 : index
    %62 = vector.load %arg6[%c0_18, %c0_19, %c0_20] : memref<1x8x1xf32, #tpu.memory_space<vmem>>, vector<1x8x1xf32>
    %63 = vector.shape_cast %62 : vector<1x8x1xf32> to vector<8x1xf32>
    %64 = vector.shape_cast %61 : vector<8x1xf32> to vector<1x8x1xf32>
    tpu.vector_store %arg6[%c0_18, %c0_19, %c0_20], %64 {strides = array<i32>} : memref<1x8x1xf32, #tpu.memory_space<vmem>>, vector<1x8x1xf32>,
    return
  }
  func.func @transform_0(%arg0: i32) -> (i32, i32, i32) {
    %c0_i32 = arith.constant 0 : i32
    %c0_i32_0 = arith.constant 0 : i32
    %c0_i32_1 = arith.constant 0 : i32
    return %arg0, %c0_i32, %c0_i32_0 : i32, i32, i32
  }
  func.func @transform_1(%arg0: i32) -> (i32, i32) {
    %c0_i32 = arith.constant 0 : i32
    %c0_i32_0 = arith.constant 0 : i32
    %c0_i32_1 = arith.constant 0 : i32
    return %c0_i32, %c0_i32_0 : i32, i32
  }
  func.func @transform_2(%arg0: i32) -> (i32, i32) {
    %c0_i32 = arith.constant 0 : i32
    %c0_i32_0 = arith.constant 0 : i32
    %c0_i32_1 = arith.constant 0 : i32
    return %c0_i32, %c0_i32_0 : i32, i32
  }
  func.func @transform_3(%arg0: i32) -> (i32, i32, i32) {
    %c0_i32 = arith.constant 0 : i32
    %c0_i32_0 = arith.constant 0 : i32
    %c0_i32_1 = arith.constant 0 : i32
    return %arg0, %c0_i32, %c0_i32_0 : i32, i32, i32
  }
  func.func @transform_4(%arg0: i32) -> (i32, i32, i32) {
    %c0_i32 = arith.constant 0 : i32
    %c0_i32_0 = arith.constant 0 : i32
    %c0_i32_1 = arith.constant 0 : i32
    return %arg0, %c0_i32, %c0_i32_0 : i32, i32, i32
  }
  func.func @transform_5(%arg0: i32) -> (i32, i32, i32) {
    %c0_i32 = arith.constant 0 : i32
    %c0_i32_0 = arith.constant 0 : i32
    %c0_i32_1 = arith.constant 0 : i32
    return %arg0, %c0_i32, %c0_i32_0 : i32, i32, i32
  }
}

</mosaic_0001>

<llo_original>
// kernel: tpu_custom_call.1
$region0: #{tpu_custom_call.1}
  #allocation0 [shape = 'u32[]', space=smem, size = 0x4, offset = 0x4, fixed_abs, tag = 'smem constant byte address 0x4 - core index']
  #allocation1 [shape = 'u32[144,128]{1,0:T(1,128)}', space=vmem, size = 0x12000, scoped, tag = 'internal scratch']
  %s0 = inlined_call_operand.hbm [shape: f32[8,128], index: 0, kind: input, shape index: {}]
  %s1 = inlined_call_operand.hbm [shape: f32[8,128], index: 1, kind: output, shape index: {}]
  %s2 = sld [smem:[#allocation0]]
  $region18: #{tpu_custom_call.1} parent=0
    _
  %s4 = ssub.s32 1, %s2
  %s5 = scalar_select 0, %s4, %s2
  $region1: #{tpu_custom_call.1} parent=0
    #allocation2 [shape = 'u8[4096]{0}', space=vmem, size = 0x1000, scoped, tag = 'input window, operand 0, single buffered']
    #allocation3 [shape = 's32[1]{0}', space=sflag, size = 0x4, scoped, tag = 'scoped memory for tpu_custom_call.1']
    #allocation4 [shape = 's32[1]{0}', space=sflag, size = 0x4, scoped, tag = 'scoped memory for tpu_custom_call.1']
    #allocation5 [shape = 'u8[4096]{0}', space=vmem, size = 0x1000, scoped, tag = 'output window, operand 0, single buffered']
    %6 = vsyncpa [#allocation3], 0
    %7 = vsyncpa [#allocation4], 0
    // Predicated region
    $region2: #{tpu_custom_call.1} parent=1 // pred_check
      _
    $region3: #{tpu_custom_call.1} parent=1 // pred_check_branch
      %9 = sbr.rel (0) target = $region5
    $region4: #{tpu_custom_call.1} parent=1 // pred_region
      %s11 = ssub.s32 128, 128
      %12 = vsyncadd [#allocation3], %s11
      %s14 = sshll.u32 [#allocation2], 4
      %s15 = int_to_ptr.vmem [resolvable:$true] %s14
      %17 = dma.hbm_to_vmem [thread:$0]  %s0, 128, %s15, [#allocation3]
    $region5: #{tpu_custom_call.1} parent=1 // pred_fallthru
      _
    // Predicated region
    $region6: #{tpu_custom_call.1} parent=1 // pred_check
      _
    $region7: #{tpu_custom_call.1} parent=1 // pred_check_branch
      %19 = sbr.rel (0) target = $region9
    $region8: #{tpu_custom_call.1} parent=1 // pred_region
      %20 = dma.done [#allocation3], 128
    $region9: #{tpu_custom_call.1} parent=1 // pred_fallthru
      _
    %v21 = vld [vmem:[#allocation2] sm:$0xff]
    %22 = vrot.lane.b32.xlu0 %v21, 1
    %v23 = vpop.permute.xlu0 %22
    %24 = vst [vmem:[#allocation5] sm:$0xff] %v23
    // Predicated region
    $region10: #{tpu_custom_call.1} parent=1 // pred_check
      _
    $region11: #{tpu_custom_call.1} parent=1 // pred_check_branch
      %26 = sbr.rel (0) target = $region13
    $region12: #{tpu_custom_call.1} parent=1 // pred_region
      %s28 = ssub.s32 128, 128
      %29 = vsyncadd [#allocation4], %s28
      %s31 = sshll.u32 [#allocation5], 4
      %s32 = int_to_ptr.vmem [resolvable:$true] %s31
      %34 = dma.vmem_to_hbm [thread:$0]  %s32, 128, %s1, [#allocation4]
    $region13: #{tpu_custom_call.1} parent=1 // pred_fallthru
      _
    // Predicated region
    $region14: #{tpu_custom_call.1} parent=1 // pred_check
      _
    $region15: #{tpu_custom_call.1} parent=1 // pred_check_branch
      %36 = sbr.rel (0) target = $region17
    $region16: #{tpu_custom_call.1} parent=1 // pred_region
      %37 = dma.done [#allocation4], 128
    $region17: #{tpu_custom_call.1} parent=1 // pred_fallthru
      _
    %38 = vsyncpa [#allocation3], 1
    %39 = vsyncpa [#allocation4], 1

// kernel: tpu_custom_call.1
$region0: #{tpu_custom_call.1}
  #allocation0 [shape = 'u32[]', space=smem, size = 0x4, offset = 0x4, fixed_abs, tag = 'smem constant byte address 0x4 - core index']
  #allocation1 [shape = 'u32[144,128]{1,0:T(1,128)}', space=vmem, size = 0x12000, scoped, tag = 'internal scratch']
  %s0 = inlined_call_operand.hbm [shape: f32[2,8,256], index: 0, kind: input, shape index: {}]
  %s1 = inlined_call_operand.hbm [shape: f32[8,72], index: 1, kind: input, shape index: {}]
  %s2 = inlined_call_operand.vmem [shape: f32[1,256], index: 2, kind: input, shape index: {}]
  %s3 = inlined_call_operand.hbm [shape: f32[2,8,256], index: 3, kind: output, shape index: {0}]
  %s4 = inlined_call_operand.vmem [shape: f32[2,8,1], index: 4, kind: output, shape index: {1}]
  %s5 = inlined_call_operand.vmem [shape: f32[2,8,1], index: 5, kind: output, shape index: {2}]
  %6 = xla_tuple %s3, %s4, %s5
  %s7 = sld [smem:[#allocation0]]
  $region69: #{tpu_custom_call.1} parent=0
    _
  %s9 = ssub.s32 1, %s7
  %s10 = scalar_select 0, %s9, %s7
  $region1: #{tpu_custom_call.1} parent=0
    #allocation2 [shape = 'u8[16384]{0}', space=vmem, size = 0x4000, scoped, tag = 'input window, operand 0']
    #allocation3 [shape = 's32[2]{0}', space=sflag, size = 0x8, scoped, tag = 'scoped memory for tpu_custom_call.1']
    #allocation4 [shape = 's32[2]{0}', space=sflag, size = 0x8, scoped, tag = 'scoped memory for tpu_custom_call.1']
    #allocation5 [shape = 'u8[4096]{0}', space=vmem, size = 0x1000, scoped, tag = 'input window, operand 1, single buffered']
    #allocation6 [shape = 's32[1]{0}', space=sflag, size = 0x4, scoped, tag = 'scoped memory for tpu_custom_call.1']
    #allocation7 [shape = 'u8[16384]{0}', space=vmem, size = 0x4000, scoped, tag = 'output window, operand 0']
    %11 = vsyncpa [#allocation3], 0
    %s12 = scalar_lea.sflag [#allocation3], 1
    %13 = vsyncpa %s12, 0
    %14 = vsyncpa [#allocation6], 0
    %15 = vsyncpa [#allocation4], 0
    %s16 = scalar_lea.sflag [#allocation4], 1
    %17 = vsyncpa %s16, 0
    loop: start=0, step=1, limit=4
    $region2: #{tpu_custom_call.1} parent=1 // loop_pre_header
      _
    $region3: #{tpu_custom_call.1} parent=1 // loop_header
      %s19 = sphi 0, %s23
      %p20 = scmp.ge.s32.totalorder %s19, 4
      %s29 = sphi 0, %s31
      %s32 = sphi 0, %s29
      %s33 = sphi 0, %s32
      %s49 = sphi 0, %s33
      %s53 = sphi 0, %s53
      %s55 = sphi 0, %s53
      %s56 = sphi 0, %s55
      %s70 = sphi 0, %s56
      %s74 = sphi 0, %s74
      %s76 = sphi 0, %s74
      %s77 = sphi 0, %s76
      %s91 = sphi 0, %s77
      %s97 = sphi 0, %s99
      %s100 = sphi 0, %s97
      %s101 = sphi 0, %s100
      %s117 = sphi 0, %s101
      %s123 = sphi 0, %s125
      %s126 = sphi 0, %s123
      %s127 = sphi 0, %s126
      %s143 = sphi 0, %s127
      %s149 = sphi 0, %s151
      %s152 = sphi 0, %s149
      %s153 = sphi 0, %s152
      %s169 = sphi 0, %s153
    $region4: #{tpu_custom_call.1} parent=1 // loop_header_branch
      %22 = sbr.rel (%p20) target = $region8
    $region5: #{tpu_custom_call.1} parent=1 // loop_body
      %s24 = ssub.s32 %s19, 1
      %s25 = ssub.s32 %s19, 2
      %s26 = sadd.s32 %s19, 1
      %s27 = ssub.s32 %s19, %s26
      %p28 = scmp.eq.s32.totalorder %s27, 0
      %s30 = sadd.s32 %s29, 1
      %s31 = scalar_select %p28, %s29, %s30
      %p34 = pneg %p28
      %p35 = scmp.eq.s32.totalorder %s19, 1
      %p36 = por %p34, %p35
      %p37 = scmp.ne.s32.totalorder %s29, %s32
      %p38 = scmp.eq.s32.totalorder %s19, 0
      %p39 = por %p37, %p38
      %p40 = scmp.ne.s32.totalorder %s29, %s32
      %p41 = scmp.eq.s32.totalorder %s24, 1
      %p42 = por %p40, %p41
      %p43 = scmp.ne.s32.totalorder %s32, %s33
      %p44 = scmp.eq.s32.totalorder %s24, 0
      %p45 = por %p43, %p44
      %p46 = scmp.ne.s32.totalorder %s32, %s33
      %p47 = scmp.eq.s32.totalorder %s25, 1
      %p48 = por %p46, %p47
      %p50 = scmp.ne.s32.totalorder %s33, %s49
      %p51 = scmp.eq.s32.totalorder %s25, 0
      %p52 = por %p50, %p51
      %s54 = sadd.s32 %s53, 1
      %p57 = scmp.eq.s32.totalorder %s19, 1
      %p58 = scmp.ne.s32.totalorder %s53, %s55
      %p59 = scmp.eq.s32.totalorder %s19, 0
      %p60 = por %p58, %p59
      %p61 = scmp.ne.s32.totalorder %s53, %s55
      %p62 = scmp.eq.s32.totalorder %s24, 1
      %p63 = por %p61, %p62
      %p64 = scmp.ne.s32.totalorder %s55, %s56
      %p65 = scmp.eq.s32.totalorder %s24, 0
      %p66 = por %p64, %p65
      %p67 = scmp.ne.s32.totalorder %s55, %s56
      %p68 = scmp.eq.s32.totalorder %s25, 1
      %p69 = por %p67, %p68
      %p71 = scmp.ne.s32.totalorder %s56, %s70
      %p72 = scmp.eq.s32.totalorder %s25, 0
      %p73 = por %p71, %p72
      %s75 = sadd.s32 %s74, 1
      %p78 = scmp.eq.s32.totalorder %s19, 1
      %p79 = scmp.ne.s32.totalorder %s74, %s76
      %p80 = scmp.eq.s32.totalorder %s19, 0
      %p81 = por %p79, %p80
      %p82 = scmp.ne.s32.totalorder %s74, %s76
      %p83 = scmp.eq.s32.totalorder %s24, 1
      %p84 = por %p82, %p83
      %p85 = scmp.ne.s32.totalorder %s76, %s77
      %p86 = scmp.eq.s32.totalorder %s24, 0
      %p87 = por %p85, %p86
      %p88 = scmp.ne.s32.totalorder %s76, %s77
      %p89 = scmp.eq.s32.totalorder %s25, 1
      %p90 = por %p88, %p89
      %p92 = scmp.ne.s32.totalorder %s77, %s91
      %p93 = scmp.eq.s32.totalorder %s25, 0
      %p94 = por %p92, %p93
      %s95 = ssub.s32 %s19, %s26
      %p96 = scmp.eq.s32.totalorder %s95, 0
      %s98 = sadd.s32 %s97, 1
      %s99 = scalar_select %p96, %s97, %s98
      %p102 = pneg %p96
      %p103 = scmp.eq.s32.totalorder %s19, 1
      %p104 = por %p102, %p103
      %p105 = scmp.ne.s32.totalorder %s97, %s100
      %p106 = scmp.eq.s32.totalorder %s19, 0
      %p107 = por %p105, %p106
      %p108 = scmp.ne.s32.totalorder %s97, %s100
      %p109 = scmp.eq.s32.totalorder %s24, 1
      %p110 = por %p108, %p109
      %p111 = scmp.ne.s32.totalorder %s100, %s101
      %p112 = scmp.eq.s32.totalorder %s24, 0
      %p113 = por %p111, %p112
      %p114 = scmp.ne.s32.totalorder %s100, %s101
      %p115 = scmp.eq.s32.totalorder %s25, 1
      %p116 = por %p114, %p115
      %p118 = scmp.ne.s32.totalorder %s101, %s117
      %p119 = scmp.eq.s32.totalorder %s25, 0
      %p120 = por %p118, %p119
      %s121 = ssub.s32 %s19, %s26
      %p122 = scmp.eq.s32.totalorder %s121, 0
      %s124 = sadd.s32 %s123, 1
      %s125 = scalar_select %p122, %s123, %s124
      %p128 = pneg %p122
      %p129 = scmp.eq.s32.totalorder %s19, 1
      %p130 = por %p128, %p129
      %p131 = scmp.ne.s32.totalorder %s123, %s126
      %p132 = scmp.eq.s32.totalorder %s19, 0
      %p133 = por %p131, %p132
      %p134 = scmp.ne.s32.totalorder %s123, %s126
      %p135 = scmp.eq.s32.totalorder %s24, 1
      %p136 = por %p134, %p135
      %p137 = scmp.ne.s32.totalorder %s126, %s127
      %p138 = scmp.eq.s32.totalorder %s24, 0
      %p139 = por %p137, %p138
      %p140 = scmp.ne.s32.totalorder %s126, %s127
      %p141 = scmp.eq.s32.totalorder %s25, 1
      %p142 = por %p140, %p141
      %p144 = scmp.ne.s32.totalorder %s127, %s143
      %p145 = scmp.eq.s32.totalorder %s25, 0
      %p146 = por %p144, %p145
      %s147 = ssub.s32 %s19, %s26
      %p148 = scmp.eq.s32.totalorder %s147, 0
      %s150 = sadd.s32 %s149, 1
      %s151 = scalar_select %p148, %s149, %s150
      %p154 = pneg %p148
      %p155 = scmp.eq.s32.totalorder %s19, 1
      %p156 = por %p154, %p155
      %p157 = scmp.ne.s32.totalorder %s149, %s152
      %p158 = scmp.eq.s32.totalorder %s19, 0
      %p159 = por %p157, %p158
      %p160 = scmp.ne.s32.totalorder %s149, %s152
      %p161 = scmp.eq.s32.totalorder %s24, 1
      %p162 = por %p160, %p161
      %p163 = scmp.ne.s32.totalorder %s152, %s153
      %p164 = scmp.eq.s32.totalorder %s24, 0
      %p165 = por %p163, %p164
      %p166 = scmp.ne.s32.totalorder %s152, %s153
      %p167 = scmp.eq.s32.totalorder %s25, 1
      %p168 = por %p166, %p167
      %p170 = scmp.ne.s32.totalorder %s153, %s169
      %p171 = scmp.eq.s32.totalorder %s25, 0
      %p172 = por %p170, %p171
      %p173 = scmp.le.s32.totalorder 1, %s19
      %p174 = scmp.lt.s32.totalorder %s19, 3
      %p175 = pnand %p173, %p174
      %p176 = pneg %p175
      // Predicated region
      $region9: #{tpu_custom_call.1} parent=5 // pred_check
        _
      $region10: #{tpu_custom_call.1} parent=5 // pred_check_branch
        %178 = sbr.rel (%p175) target = $region12
      $region11: #{tpu_custom_call.1} parent=5 // pred_region
        %s179 = ssub.s32 %s19, 1
        // Predicated region
        $region13: #{tpu_custom_call.1} parent=11 // pred_check
          %p180 = pneg %p66
        $region14: #{tpu_custom_call.1} parent=11 // pred_check_branch
          %182 = sbr.rel (%p180) target = $region16
        $region15: #{tpu_custom_call.1} parent=11 // pred_region
          %s184 = ssub.s32 128, 128
          %185 = vsyncadd [#allocation6], %s184
          %s187 = sshll.u32 [#allocation5], 4
          %s188 = int_to_ptr.vmem [resolvable:$true] %s187
          %190 = dma.hbm_to_vmem [thread:$0]  %s1, 128, %s188, [#allocation6]
        $region16: #{tpu_custom_call.1} parent=11 // pred_fallthru
          _
        // Predicated region
        $region17: #{tpu_custom_call.1} parent=11 // pred_check
          %p191 = pneg %p87
        $region18: #{tpu_custom_call.1} parent=11 // pred_check_branch
          %193 = sbr.rel (%p191) target = $region20
        $region19: #{tpu_custom_call.1} parent=11 // pred_region
          _
        $region20: #{tpu_custom_call.1} parent=11 // pred_fallthru
          _
      $region12: #{tpu_custom_call.1} parent=5 // pred_fallthru
        _
      %p194 = scmp.lt.s32.totalorder %s19, 2
      // Predicated region
      $region21: #{tpu_custom_call.1} parent=5 // pred_check
        %p195 = pneg %p194
      $region22: #{tpu_custom_call.1} parent=5 // pred_check_branch
        %197 = sbr.rel (%p195) target = $region24
      $region23: #{tpu_custom_call.1} parent=5 // pred_region
        // Predicated region
        $region25: #{tpu_custom_call.1} parent=23 // pred_check
          %p198 = pneg %p39
        $region26: #{tpu_custom_call.1} parent=23 // pred_check_branch
          %200 = sbr.rel (%p198) target = $region28
        $region27: #{tpu_custom_call.1} parent=23 // pred_region
          %s201 = sand.u32 %s29, 1
          %s202 = scalar_lea.sflag [#allocation3], %s201
          %s203 = sand.u32 %s29, 1
          %s204 = smul.addr %s203, 16
          %s205 = scalar_lea.vmem [#allocation2], %s204
          %s207 = ssub.s32 256, 256
          %208 = vsyncadd %s202, %s207
          %s209 = smul.addr %s19, 2
          %s210 = smul.addr %s209, 128
          %s211 = scalar_lea.hbm %s0, %s210
          %s213 = sshll.u32 %s205, 4
          %s214 = int_to_ptr.vmem [resolvable:$true] %s213
          %216 = dma.hbm_to_vmem [thread:$0]  %s211, 256, %s214, %s202
        $region28: #{tpu_custom_call.1} parent=23 // pred_fallthru
          _
      $region24: #{tpu_custom_call.1} parent=5 // pred_fallthru
        _
      %p217 = scmp.le.s32.totalorder 1, %s19
      %p218 = scmp.lt.s32.totalorder %s19, 3
      %p219 = pnand %p217, %p218
      %p220 = pneg %p219
      // Predicated region
      $region29: #{tpu_custom_call.1} parent=5 // pred_check
        _
      $region30: #{tpu_custom_call.1} parent=5 // pred_check_branch
        %222 = sbr.rel (%p219) target = $region32
      $region31: #{tpu_custom_call.1} parent=5 // pred_region
        %s223 = ssub.s32 %s19, 1
        %s224 = sand.u32 %s32, 1
        %s225 = scalar_lea.sflag [#allocation3], %s224
        %s226 = sand.u32 %s32, 1
        %s227 = smul.addr %s226, 16
        %s228 = scalar_lea.vmem [#allocation2], %s227
        // Predicated region
        $region33: #{tpu_custom_call.1} parent=31 // pred_check
          %p229 = pneg %p45
        $region34: #{tpu_custom_call.1} parent=31 // pred_check_branch
          %231 = sbr.rel (%p229) target = $region36
        $region35: #{tpu_custom_call.1} parent=31 // pred_region
          %232 = dma.done %s225, 256
        $region36: #{tpu_custom_call.1} parent=31 // pred_fallthru
          _
        // Predicated region
        $region37: #{tpu_custom_call.1} parent=31 // pred_check
          %p233 = pneg %p66
        $region38: #{tpu_custom_call.1} parent=31 // pred_check_branch
          %235 = sbr.rel (%p233) target = $region40
        $region39: #{tpu_custom_call.1} parent=31 // pred_region
          %236 = dma.done [#allocation6], 128
        $region40: #{tpu_custom_call.1} parent=31 // pred_fallthru
          _
        %s237 = sand.u32 %s32, 1
        %s238 = scalar_lea.sflag [#allocation3], %s237
        %s239 = sand.u32 %s32, 1
        %s240 = smul.addr %s239, 16
        %s241 = scalar_lea.vmem [#allocation2], %s240
        %p242 = pneg %p45
        %p243 = pneg %p42
        %p244 = pneg %p66
        %p245 = pneg %p63
        %p246 = pneg %p87
        %p247 = pneg %p84
        %p248 = pneg %p113
        %p249 = pneg %p110
        %s250 = sand.u32 %s100, 1
        %s251 = scalar_lea.sflag [#allocation4], %s250
        %s252 = sand.u32 %s100, 1
        %s253 = smul.addr %s252, 16
        %s254 = scalar_lea.vmem [#allocation7], %s253
        %p255 = pneg %p139
        %p256 = pneg %p136
        %p257 = scmp.lt.s32.totalorder %s24, 1
        %s258 = scalar_select %p257, %s24, 1
        %s259 = smul.addr %s258, 8
        %s260 = scalar_lea.vmem %s4, %s259
        %p261 = pneg %p165
        %p262 = pneg %p162
        %p263 = scmp.lt.s32.totalorder %s24, 1
        %s264 = scalar_select %p263, %s24, 1
        %s265 = smul.addr %s264, 8
        %s266 = scalar_lea.vmem %s5, %s265
        %p267 = scmp.lt.s32.totalorder %s24, 1
        %s268 = scalar_select %p267, %s24, 1
        %s269 = smul.addr %s268, 8
        %s270 = scalar_lea.vmem %s4, %s269
        %p271 = scmp.lt.s32.totalorder %s24, 1
        %s272 = scalar_select %p271, %s24, 1
        %s273 = smul.addr %s272, 8
        %s274 = scalar_lea.vmem %s5, %s273
        %v275 = vld [vmem:[%s228] sm:$0xff]
        %v276 = vld [vmem:[%s228 + $0x8] sm:$0xff]
        %v277 = vld [vmem:[%s2] sm:$0x3]
        %v278 = vlaneseq
        %v279 = vand.u32 %v278, 127
        %v280 = vadd.s32 %v279, 128
        %vm281 = vcmp.ge.s32.totalorder %v279, 16
        %vm282 = vcmp.ge.s32.totalorder %v280, 16
        %v283 = vsel %vm281, 1, 0
        %v284 = vsel %vm282, 1, 0
        %v285 = vcvt.s32.f32 %v283
        %v286 = vcvt.s32.f32 %v284
        %vm287 = vcmp.lt.s32.totalorder %v279, 240
        %vm288 = vcmp.lt.s32.totalorder %v280, 240
        %v289 = vsel %vm287, 1, 0
        %v290 = vsel %vm288, 1, 0
        %v291 = vcvt.s32.f32 %v289
        %v292 = vcvt.s32.f32 %v290
        %vm293 = vcmp.ge.f32.partialorder %v277, 1.0
        %v294 = vsel %vm293, 1, 0
        %v295 = vcvt.s32.f32 %v294
        %vm296 = vcmp.le.f32.partialorder %v277, 14.0
        %v297 = vsel %vm296, 1, 0
        %v298 = vcvt.s32.f32 %v297
        %299 = vrot.lane.b32.xlu0 %v275, 17
        %v300 = vpop.permute.xlu0 %299
        %301 = vrot.lane.b32.xlu0 %v276, 17
        %v302 = vpop.permute.xlu0 %301
        %vm303 = vcmp.lt.s32.totalorder %v279, 17
        %v304 = vsel %vm303, %v300, %v302
        %v305 = vsel %vm303, %v302, %v300
        %v307 = vlaneseq
        %v308 = vshrl.u32 %v307, 7
        %v309 = vsub.s32 0, %v308
        %v310 = vrot.slane %v295, %v309
        %v311 = vlaneseq
        %v312 = vshrl.u32 %v311, 7
        %v313 = vsub.s32 1, %v312
        %v314 = vrot.slane %v295, %v313
        %v317 = vmul.f32 %v285, %v310
        %v318 = vmul.f32 %v286, %v314
        %v319 = vlaneseq
        %v320 = vshrl.u32 %v319, 7
        %v321 = vsub.s32 0, %v320
        %v322 = vrot.slane %v317, %v321
        %v323 = vlaneseq
        %v324 = vshrl.u32 %v323, 7
        %v325 = vsub.s32 0, %v324
        %v326 = vrot.slane %v318, %v325
        %v327 = vmul.f32 %v305, %v322
        %v328 = vmul.f32 %v304, %v326
        %329 = vrot.lane.b32.xlu0 %v275, 16
        %v330 = vpop.permute.xlu0 %329
        %331 = vrot.lane.b32.xlu0 %v276, 16
        %v332 = vpop.permute.xlu0 %331
        %vm333 = vcmp.lt.s32.totalorder %v279, 16
        %v334 = vsel %vm333, %v330, %v332
        %v335 = vsel %vm333, %v332, %v330
        %v336 = vmul.f32 %v335, %v285
        %v337 = vmul.f32 %v334, %v286
        %338 = vrot.lane.b32.xlu0 %v275, 15
        %v339 = vpop.permute.xlu0 %338
        %340 = vrot.lane.b32.xlu0 %v276, 15
        %v341 = vpop.permute.xlu0 %340
        %vm342 = vcmp.lt.s32.totalorder %v279, 15
        %v343 = vsel %vm342, %v339, %v341
        %v344 = vsel %vm342, %v341, %v339
        %v346 = vlaneseq
        %v347 = vshrl.u32 %v346, 7
        %v348 = vsub.s32 0, %v347
        %v349 = vrot.slane %v298, %v348
        %v350 = vlaneseq
        %v351 = vshrl.u32 %v350, 7
        %v352 = vsub.s32 1, %v351
        %v353 = vrot.slane %v298, %v352
        %v356 = vmul.f32 %v285, %v349
        %v357 = vmul.f32 %v286, %v353
        %v358 = vlaneseq
        %v359 = vshrl.u32 %v358, 7
        %v360 = vsub.s32 0, %v359
        %v361 = vrot.slane %v356, %v360
        %v362 = vlaneseq
        %v363 = vshrl.u32 %v362, 7
        %v364 = vsub.s32 0, %v363
        %v365 = vrot.slane %v357, %v364
        %v366 = vmul.f32 %v344, %v361
        %v367 = vmul.f32 %v343, %v365
        %368 = vrot.lane.b32.xlu0 %v275, 1
        %v369 = vpop.permute.xlu0 %368
        %370 = vrot.lane.b32.xlu0 %v276, 1
        %v371 = vpop.permute.xlu0 %370
        %vm372 = vcmp.lt.s32.totalorder %v279, 1
        %v373 = vsel %vm372, %v369, %v371
        %v374 = vsel %vm372, %v371, %v369
        %v375 = vmul.f32 %v374, %v310
        %v376 = vmul.f32 %v373, %v314
        %377 = vrot.lane.b32.xlu0 %v275, 127
        %v378 = vpop.permute.xlu0 %377
        %379 = vrot.lane.b32.xlu0 %v276, 127
        %v380 = vpop.permute.xlu0 %379
        %vm381 = vcmp.lt.s32.totalorder %v279, 127
        %v382 = vsel %vm381, %v378, %v380
        %v383 = vsel %vm381, %v380, %v378
        %v384 = vmul.f32 %v382, %v349
        %v385 = vmul.f32 %v383, %v353
        %386 = vrot.lane.b32.xlu0 %v275, 113
        %v387 = vpop.permute.xlu0 %386
        %388 = vrot.lane.b32.xlu0 %v276, 113
        %v389 = vpop.permute.xlu0 %388
        %vm390 = vcmp.lt.s32.totalorder %v279, 113
        %v391 = vsel %vm390, %v387, %v389
        %v392 = vsel %vm390, %v389, %v387
        %v393 = vmul.f32 %v291, %v310
        %v394 = vmul.f32 %v292, %v314
        %v395 = vlaneseq
        %v396 = vshrl.u32 %v395, 7
        %v397 = vsub.s32 0, %v396
        %v398 = vrot.slane %v393, %v397
        %v399 = vlaneseq
        %v400 = vshrl.u32 %v399, 7
        %v401 = vsub.s32 0, %v400
        %v402 = vrot.slane %v394, %v401
        %v403 = vmul.f32 %v391, %v398
        %v404 = vmul.f32 %v392, %v402
        %405 = vrot.lane.b32.xlu0 %v275, 112
        %v406 = vpop.permute.xlu0 %405
        %407 = vrot.lane.b32.xlu0 %v276, 112
        %v408 = vpop.permute.xlu0 %407
        %vm409 = vcmp.lt.s32.totalorder %v279, 112
        %v410 = vsel %vm409, %v406, %v408
        %v411 = vsel %vm409, %v408, %v406
        %v412 = vmul.f32 %v410, %v291
        %v413 = vmul.f32 %v411, %v292
        %414 = vrot.lane.b32.xlu0 %v275, 111
        %v415 = vpop.permute.xlu0 %414
        %416 = vrot.lane.b32.xlu0 %v276, 111
        %v417 = vpop.permute.xlu0 %416
        %vm418 = vcmp.lt.s32.totalorder %v279, 111
        %v419 = vsel %vm418, %v415, %v417
        %v420 = vsel %vm418, %v417, %v415
        %v421 = vmul.f32 %v291, %v349
        %v422 = vmul.f32 %v292, %v353
        %v423 = vlaneseq
        %v424 = vshrl.u32 %v423, 7
        %v425 = vsub.s32 0, %v424
        %v426 = vrot.slane %v421, %v425
        %v427 = vlaneseq
        %v428 = vshrl.u32 %v427, 7
        %v429 = vsub.s32 0, %v428
        %v430 = vrot.slane %v422, %v429
        %v431 = vmul.f32 %v419, %v426
        %v432 = vmul.f32 %v420, %v430
        %v433 = vld [vmem:[#allocation5] sm:$0xff]
        %vm434 = vcmask 588800
        %v436 = vsel %vm434, %v433, 0
        %438 = vmatprep.subr.mxu0 %v328
        %439 = vmatpush1.msra.mxu0 %v327
        %440 = vmatprep.subr.mxu0 %v337
        %441 = vmatpush1.msra.mxu0 %v336
        %442 = vmatprep.subr.mxu0 %v367
        %443 = vmatpush1.msra.mxu0 %v366
        %444 = vmatprep.subr.mxu0 %v376
        %445 = vmatpush1.msra.mxu0 %v375
        %446 = vmatprep.subr.mxu0 %v276
        %447 = vmatpush1.msra.mxu0 %v275
        %448 = vmatprep.subr.mxu0 %v385
        %449 = vmatpush1.msra.mxu0 %v384
        %450 = vmatprep.subr.mxu0 %v404
        %451 = vmatpush1.msra.mxu0 %v403
        %452 = vmatprep.subr.mxu0 %v413
        %453 = vmatpush1.msra.mxu0 %v412
        %454 = vmatprep.subr.mxu0 %v432
        %455 = vmatpush1.msra.mxu0 %v431
        %456 = vmatprep.subr.mxu0 0.0
        %457 = vmatpush1.msra.mxu0 0.0
        %458 = vmatprep.subr.mxu0 0.0
        %459 = vmatpush1.msra.mxu0 0.0
        %460 = vmatprep.subr.mxu0 0.0
        %461 = vmatpush1.msra.mxu0 0.0
        %462 = vmatprep.subr.mxu0 0.0
        %463 = vmatpush1.msra.mxu0 0.0
        %464 = vmatprep.subr.mxu0 0.0
        %465 = vmatpush1.msra.mxu0 0.0
        %466 = vmatprep.subr.mxu0 0.0
        %467 = vmatpush1.msra.mxu0 0.0
        %468 = vmatprep.subr.mxu0 0.0
        %469 = vmatpush1.msra.mxu0 0.0
        %470 = vmatprep.subr.mxu0 0.0
        %471 = vmatpush1.msra.mxu0 0.0
        %472 = vmatprep.subr.mxu0 0.0
        %473 = vmatpush1.msra.mxu0 0.0
        %474 = vmatprep.subr.mxu0 0.0
        %475 = vmatpush1.msra.mxu0 0.0
        %476 = vmatprep.subr.mxu0 0.0
        %477 = vmatpush1.msra.mxu0 0.0
        %478 = vmatprep.subr.mxu0 0.0
        %479 = vmatpush1.msra.mxu0 0.0
        %480 = vmatprep.subr.mxu0 0.0
        %481 = vmatpush1.msra.mxu0 0.0
        %482 = vmatprep.subr.mxu0 0.0
        %483 = vmatpush1.msra.mxu0 0.0
        %484 = vmatprep.subr.mxu0 0.0
        %485 = vmatpush1.msra.mxu0 0.0
        %486 = vmatprep.subr.mxu0 0.0
        %487 = vmatpush1.msra.mxu0 0.0
        %488 = vmatprep.subr.mxu0 0.0
        %489 = vmatpush1.msra.mxu0 0.0
        %490 = vmatprep.subr.mxu0 0.0
        %491 = vmatpush1.msra.mxu0 0.0
        %492 = vmatprep.subr.mxu0 0.0
        %493 = vmatpush1.msra.mxu0 0.0
        %494 = vmatprep.subr.mxu0 0.0
        %495 = vmatpush1.msra.mxu0 0.0
        %496 = vmatprep.subr.mxu0 0.0
        %497 = vmatpush1.msra.mxu0 0.0
        %498 = vmatprep.subr.mxu0 0.0
        %499 = vmatpush1.msra.mxu0 0.0
        %500 = vmatprep.subr.mxu0 0.0
        %501 = vmatpush1.msra.mxu0 0.0
        %502 = vmatprep.mubr.f32.mxu0 0.0
        %503 = vmatmul.mubr.f32.gmra.mrb[0].mxu0 %v436
        %v504 = vpop.f32.mrb[0].mxu0
        %v505 = vadd.f32 0.0, %v504
        %v506 = vpop.f32.mrb[0].mxu0
        %v507 = vadd.f32 0.0, %v506
        %508 = vdwg.mxu0
        %509 = vst [vmem:[%s254] sm:$0xff] %v505
        %510 = vst [vmem:[%s254 + $0x8] sm:$0xff] %v507
        %v511 = vadd.f32 %v505, %v507
        %512 = vadd.xlane.f32.xlu0 %v511
        %v513 = vpop.xlane.xlu0 %512
        %vm514 = vcmask 7168
        %515 = vst.msk [vmem:[%s270] sm:$0xff] %vm514, %v513
        %v516 = vmul.f32 %v505, %v505
        %v517 = vmul.f32 %v507, %v507
        %v518 = vadd.f32 %v516, %v517
        %519 = vadd.xlane.f32.xlu0 %v518
        %v520 = vpop.xlane.xlu0 %519
        %521 = vst.msk [vmem:[%s274] sm:$0xff] %vm514, %v520
        %s522 = sand.u32 %s100, 1
        %s523 = scalar_lea.sflag [#allocation4], %s522
        %s524 = sand.u32 %s100, 1
        %s525 = smul.addr %s524, 16
        %s526 = scalar_lea.vmem [#allocation7], %s525
        %p527 = scmp.lt.s32.totalorder %s24, 1
        %s528 = scalar_select %p527, %s24, 1
        %s529 = smul.addr %s528, 8
        %s530 = scalar_lea.vmem %s4, %s529
        %p531 = scmp.lt.s32.totalorder %s24, 1
        %s532 = scalar_select %p531, %s24, 1
        %s533 = smul.addr %s532, 8
        %s534 = scalar_lea.vmem %s5, %s533
        // Predicated region
        $region41: #{tpu_custom_call.1} parent=31 // pred_check
          %p535 = pneg %p110
        $region42: #{tpu_custom_call.1} parent=31 // pred_check_branch
          %537 = sbr.rel (%p535) target = $region44
        $region43: #{tpu_custom_call.1} parent=31 // pred_region
          %s539 = ssub.s32 256, 256
          %540 = vsyncadd %s523, %s539
          %s541 = smul.addr %s24, 2
          %s542 = smul.addr %s541, 128
          %s543 = scalar_lea.hbm %s3, %s542
          %s545 = sshll.u32 %s526, 4
          %s546 = int_to_ptr.vmem [resolvable:$true] %s545
          %548 = dma.vmem_to_hbm [thread:$0]  %s546, 256, %s543, %s523
        $region44: #{tpu_custom_call.1} parent=31 // pred_fallthru
          _
        // Predicated region
        $region45: #{tpu_custom_call.1} parent=31 // pred_check
          %p549 = pneg %p136
        $region46: #{tpu_custom_call.1} parent=31 // pred_check_branch
          %551 = sbr.rel (%p549) target = $region48
        $region47: #{tpu_custom_call.1} parent=31 // pred_region
          _
        $region48: #{tpu_custom_call.1} parent=31 // pred_fallthru
          _
        // Predicated region
        $region49: #{tpu_custom_call.1} parent=31 // pred_check
          %p552 = pneg %p162
        $region50: #{tpu_custom_call.1} parent=31 // pred_check_branch
          %554 = sbr.rel (%p552) target = $region52
        $region51: #{tpu_custom_call.1} parent=31 // pred_region
          _
        $region52: #{tpu_custom_call.1} parent=31 // pred_fallthru
          _
      $region32: #{tpu_custom_call.1} parent=5 // pred_fallthru
        _
      %p555 = scmp.le.s32.totalorder 2, %s19
      // Predicated region
      $region53: #{tpu_custom_call.1} parent=5 // pred_check
        %p556 = pneg %p555
      $region54: #{tpu_custom_call.1} parent=5 // pred_check_branch
        %558 = sbr.rel (%p556) target = $region56
      $region55: #{tpu_custom_call.1} parent=5 // pred_region
        %s559 = ssub.s32 %s19, 2
        // Predicated region
        $region57: #{tpu_custom_call.1} parent=55 // pred_check
          %p560 = pneg %p116
        $region58: #{tpu_custom_call.1} parent=55 // pred_check_branch
          %562 = sbr.rel (%p560) target = $region60
        $region59: #{tpu_custom_call.1} parent=55 // pred_region
          %s563 = sand.u32 %s101, 1
          %s564 = scalar_lea.sflag [#allocation4], %s563
          %s565 = sand.u32 %s101, 1
          %s566 = smul.addr %s565, 16
          %s567 = scalar_lea.vmem [#allocation7], %s566
          %568 = dma.done %s564, 256
        $region60: #{tpu_custom_call.1} parent=55 // pred_fallthru
          _
        // Predicated region
        $region61: #{tpu_custom_call.1} parent=55 // pred_check
          %p569 = pneg %p142
        $region62: #{tpu_custom_call.1} parent=55 // pred_check_branch
          %571 = sbr.rel (%p569) target = $region64
        $region63: #{tpu_custom_call.1} parent=55 // pred_region
          %p572 = scmp.lt.s32.totalorder %s25, 1
          %s573 = scalar_select %p572, %s25, 1
          %s574 = smul.addr %s573, 8
          %s575 = scalar_lea.vmem %s4, %s574
        $region64: #{tpu_custom_call.1} parent=55 // pred_fallthru
          _
        // Predicated region
        $region65: #{tpu_custom_call.1} parent=55 // pred_check
          %p576 = pneg %p168
        $region66: #{tpu_custom_call.1} parent=55 // pred_check_branch
          %578 = sbr.rel (%p576) target = $region68
        $region67: #{tpu_custom_call.1} parent=55 // pred_region
          %p579 = scmp.lt.s32.totalorder %s25, 1
          %s580 = scalar_select %p579, %s25, 1
          %s581 = smul.addr %s580, 8
          %s582 = scalar_lea.vmem %s5, %s581
        $region68: #{tpu_custom_call.1} parent=55 // pred_fallthru
          _
      $region56: #{tpu_custom_call.1} parent=5 // pred_fallthru
        _
    $region6: #{tpu_custom_call.1} parent=1 // loop_footer
      %s23 = sadd.s32 1, %s19
    $region7: #{tpu_custom_call.1} parent=1 // loop_footer_branch
      %18 = sbr.rel target = $region3
    $region8: #{tpu_custom_call.1} parent=1 // loop_exit
      _
    %583 = vsyncpa [#allocation3], 1
    %s584 = scalar_lea.sflag [#allocation3], 1
    %585 = vsyncpa %s584, 1
    %586 = vsyncpa [#allocation6], 1
    %587 = vsyncpa [#allocation4], 1
    %s588 = scalar_lea.sflag [#allocation4], 1
    %589 = vsyncpa %s588, 1

</llo_original>
